<compile_context>
chip_gen: v6e
topology: v6e:2x2x1
jax: 0.10.0
libtpu: 0.0.40
codegen_flags: <defaults>
</compile_context>

<pallas_src>
import jax
import jax.numpy as jnp
from jax.experimental import pallas as pl
from jax.experimental.pallas import tpu as pltpu  # noqa: F401  (kept for the scale-up path)


def rnn_kernel(x_ref, w_ih_t_ref, w_hh_t_ref, bias_h_ref, w_out_t_ref, bias_out_ref, out_ref):
    """Whole forward pass in one kernel (shapes are tiny; everything fits in VMEM).

    x_ref:        (S*B, D)  bf16 time-major rows [t0 b0..b{B-1}, t1 b0.., ...], B padded to 8k
    w_ih_t_ref:   (D, H)    bf16 pre-transposed input->hidden weights
    w_hh_t_ref:   (H, H)    bf16 pre-transposed hidden->hidden weights
    bias_h_ref:   (1, H)    f32  b_ih + b_hh (folded in wrapper)
    w_out_t_ref:  (H, Cp)   f32  pre-transposed output weights, zero-padded to Cp = 128 lanes
    bias_out_ref: (1, Cp)   f32  S * b_out, padded columns set to -1e9
    out_ref:      (B, Cp)   f32  log-softmax (padded columns are garbage, sliced off outside)
    """
    SB, _ = x_ref.shape
    B = out_ref.shape[0]
    S = SB // B

    w_hh_t = w_hh_t_ref[...]  # bf16, loaded once, reused every step

    # ---- Hoisted input projection: one matmul, off the serial critical path (f32 acc). ----
    x2h = (jnp.dot(x_ref[...], w_ih_t_ref[...], preferred_element_type=jnp.float32)
           + bias_h_ref[...])                                   # (S*B, H) f32

    # ---- Recurrence: strict serial MXU->tanh chain; h / h_sum carried in vregs. ----
    h = jnp.tanh(x2h[0:B, :])                                   # step 0: h_prev == 0
    h_sum = h
    for t in range(1, S):                                       # static, fully unrolled
        rec = jnp.dot(h.astype(jnp.bfloat16), w_hh_t,
                      preferred_element_type=jnp.float32)       # bf16 operands, f32 acc
        h = jnp.tanh(x2h[t * B:(t + 1) * B, :] + rec)           # sublane-aligned static slice
        h_sum = h_sum + h

    # ---- Collapsed output projection:  sum_t (W h_t + b) == W (sum_t h_t) + S*b  (f32). ----
    z = (jnp.dot(h_sum, w_out_t_ref[...], preferred_element_type=jnp.float32)
         + bias_out_ref[...])                                   # (B, Cp)

    # ---- LogSoftmax over the (padded) class dim; -1e9 pads underflow to 0 in exp. ----
    m = jnp.max(z, axis=1, keepdims=True)
    lse = jnp.log(jnp.sum(jnp.exp(z - m), axis=1, keepdims=True)) + m
    out_ref[...] = (z - lse).astype(out_ref.dtype)


def rnn_forward(x, w_ih, w_hh, b_ih, b_hh, w_out, b_out):
    S, B, D = x.shape
    H = w_ih.shape[0]
    C = w_out.shape[0]
    C_pad = 128                                   # lane-dense output -> unmasked stores
    B_pad = max(8, ((B + 7) // 8) * 8)            # full sublane groups

    if B_pad != B:
        x = jnp.pad(x, ((0, 0), (0, B_pad - B), (0, 0)))
    # Flatten + cast in the wrapper (reshape of a contiguous array is free in XLA).
    x_flat = x.reshape(S * B_pad, D).astype(jnp.bfloat16)

    # Pre-transpose weights / fold biases outside the kernel.
    w_ih_t = w_ih.T.astype(jnp.bfloat16)                         # (D, H)
    w_hh_t = w_hh.T.astype(jnp.bfloat16)                         # (H, H)
    bias_h = (b_ih + b_hh).reshape(1, H).astype(jnp.float32)     # (1, H)

    # Output weights zero-padded to 128 lanes; padded bias columns get -1e9 so they never
    # influence the logsumexp. Bias pre-scaled by S (output-sum collapse).
    w_out_t = jnp.zeros((H, C_pad), jnp.float32).at[:, :C].set(w_out.T.astype(jnp.float32))
    bias_out = jnp.full((1, C_pad), -1e9, jnp.float32).at[:, :C].set(
        (float(S) * b_out).reshape(1, C).astype(jnp.float32))

    full = lambda shape: pl.BlockSpec(shape, lambda: tuple(0 for _ in shape))

    out = pl.pallas_call(
        rnn_kernel,
        out_shape=jax.ShapeDtypeStruct((B_pad, C_pad), jnp.float32),
        grid=(),
        in_specs=[
            full((S * B_pad, D)),
            full((D, H)),
            full((H, H)),
            full((1, H)),
            full((H, C_pad)),
            full((1, C_pad)),
        ],
        out_specs=full((B_pad, C_pad)),
    )(x_flat, w_ih_t, w_hh_t, bias_h, w_out_t, bias_out)

    return out[:B, :C]


def reference_forward(x, w_ih, w_hh, b_ih, b_hh, w_out, b_out):
    """Plain-JAX f32 reference replicating torch.nn.RNN + Linear + sum over time + LogSoftmax."""
    S, B, D = x.shape
    H = w_ih.shape[0]
    h = jnp.zeros((B, H), jnp.float32)
    z_sum = jnp.zeros((B, w_out.shape[0]), jnp.float32)
    for t in range(S):
        h = jnp.tanh(x[t] @ w_ih.T + h @ w_hh.T + b_ih[0] + b_hh[0])
        z_sum = z_sum + (h @ w_out.T + b_out[0])
    return jax.nn.log_softmax(z_sum, axis=1)


if __name__ == "__main__":
    # Small shapes consistent with the module: seq=8, batch=4, input_dim=16, hidden=32, classes=5.
    S, B, D, H, C = 8, 4, 16, 32, 5

    key = jax.random.PRNGKey(0)
    keys = jax.random.split(key, 8)

    # Deterministic "PyTorch-like" init: uniform(-1/sqrt(H), 1/sqrt(H)).
    bound = 1.0 / (H ** 0.5)
    w_ih = jax.random.uniform(keys[0], (H, D), jnp.float32, -bound, bound)
    w_hh = jax.random.uniform(keys[1], (H, H), jnp.float32, -bound, bound)
    b_ih = jax.random.uniform(keys[2], (1, H), jnp.float32, -bound, bound)
    b_hh = jax.random.uniform(keys[3], (1, H), jnp.float32, -bound, bound)
    w_out = jax.random.uniform(keys[4], (C, H), jnp.float32, -bound, bound)
    b_out = jax.random.uniform(keys[5], (1, C), jnp.float32, -bound, bound)

    x = jax.random.normal(keys[6], (S, B, D), jnp.float32)

    out = rnn_forward(x, w_ih, w_hh, b_ih, b_hh, w_out, b_out)
    out = jax.block_until_ready(out)

    ref = reference_forward(x, w_ih, w_hh, b_ih, b_hh, w_out, b_out)
    assert out.shape == (B, C)
    # bf16 matmul operands in the kernel -> loosened tolerance vs the pure-f32 reference.
    assert jnp.allclose(out, ref, atol=1e-1, rtol=1e-2), "mismatch vs reference"

    print("KERNEL_OK")
</pallas_src>

<mosaic_0001>
module attributes {stable_mosaic.version = 11 : i64} {
  func.func @rnn_kernel(%arg0: memref<64x16xbf16, #tpu.memory_space<vmem>>, %arg1: memref<16x32xbf16, #tpu.memory_space<vmem>>, %arg2: memref<32x32xbf16, #tpu.memory_space<vmem>>, %arg3: memref<1x32xf32, #tpu.memory_space<vmem>>, %arg4: memref<32x128xf32, #tpu.memory_space<vmem>>, %arg5: memref<1x128xf32, #tpu.memory_space<vmem>>, %arg6: memref<8x128xf32, #tpu.memory_space<vmem>>) attributes {dimension_semantics = [], scalar_prefetch = 0 : i64, scratch_operands = 0 : i64, tpu.core_type = #tpu.core_type<tc>} {
    %c0 = arith.constant 0 : index
    %c0_0 = arith.constant 0 : index
    %0 = vector.load %arg2[%c0, %c0_0] : memref<32x32xbf16, #tpu.memory_space<vmem>>, vector<32x32xbf16>
    %c0_1 = arith.constant 0 : index
    %c0_2 = arith.constant 0 : index
    %1 = vector.load %arg0[%c0_1, %c0_2] : memref<64x16xbf16, #tpu.memory_space<vmem>>, vector<64x16xbf16>
    %c0_3 = arith.constant 0 : index
    %c0_4 = arith.constant 0 : index
    %2 = vector.load %arg1[%c0_3, %c0_4] : memref<16x32xbf16, #tpu.memory_space<vmem>>, vector<16x32xbf16>
    %cst = arith.constant dense<0.000000e+00> : vector<64x32xf32>
    %3 = tpu.matmul %1, %2, %cst {dimension_numbers = #tpu.dot_dimension_numbers<[1], [0], [0], [1], [0, 0, 1, 1], [], []>} : vector<64x16xbf16>, vector<16x32xbf16>, vector<64x32xf32> -> vector<64x32xf32>
    %c0_5 = arith.constant 0 : index
    %c0_6 = arith.constant 0 : index
    %4 = vector.load %arg3[%c0_5, %c0_6] : memref<1x32xf32, #tpu.memory_space<vmem>>, vector<1x32xf32>
    %5 = vector.broadcast %4 : vector<1x32xf32> to vector<64x32xf32>
    %6 = arith.addf %3, %5 : vector<64x32xf32>
    %7 = vector.extract_strided_slice %6 {offsets = [0, 0], sizes = [8, 32], strides = [1, 1]} : vector<64x32xf32> to vector<8x32xf32>
    %8 = math.tanh %7 : vector<8x32xf32>
    %9 = arith.truncf %8 : vector<8x32xf32> to vector<8x32xbf16>
    %cst_7 = arith.constant dense<0.000000e+00> : vector<8x32xf32>
    %10 = tpu.matmul %9, %0, %cst_7 {dimension_numbers = #tpu.dot_dimension_numbers<[1], [0], [0], [1], [0, 0, 1, 1], [], []>} : vector<8x32xbf16>, vector<32x32xbf16>, vector<8x32xf32> -> vector<8x32xf32>
    %11 = vector.extract_strided_slice %6 {offsets = [8, 0], sizes = [8, 32], strides = [1, 1]} : vector<64x32xf32> to vector<8x32xf32>
    %12 = arith.addf %11, %10 : vector<8x32xf32>
    %13 = math.tanh %12 : vector<8x32xf32>
    %14 = arith.addf %8, %13 : vector<8x32xf32>
    %15 = arith.truncf %13 : vector<8x32xf32> to vector<8x32xbf16>
    %cst_8 = arith.constant dense<0.000000e+00> : vector<8x32xf32>
    %16 = tpu.matmul %15, %0, %cst_8 {dimension_numbers = #tpu.dot_dimension_numbers<[1], [0], [0], [1], [0, 0, 1, 1], [], []>} : vector<8x32xbf16>, vector<32x32xbf16>, vector<8x32xf32> -> vector<8x32xf32>
    %17 = vector.extract_strided_slice %6 {offsets = [16, 0], sizes = [8, 32], strides = [1, 1]} : vector<64x32xf32> to vector<8x32xf32>
    %18 = arith.addf %17, %16 : vector<8x32xf32>
    %19 = math.tanh %18 : vector<8x32xf32>
    %20 = arith.addf %14, %19 : vector<8x32xf32>
    %21 = arith.truncf %19 : vector<8x32xf32> to vector<8x32xbf16>
    %cst_9 = arith.constant dense<0.000000e+00> : vector<8x32xf32>
    %22 = tpu.matmul %21, %0, %cst_9 {dimension_numbers = #tpu.dot_dimension_numbers<[1], [0], [0], [1], [0, 0, 1, 1], [], []>} : vector<8x32xbf16>, vector<32x32xbf16>, vector<8x32xf32> -> vector<8x32xf32>
    %23 = vector.extract_strided_slice %6 {offsets = [24, 0], sizes = [8, 32], strides = [1, 1]} : vector<64x32xf32> to vector<8x32xf32>
    %24 = arith.addf %23, %22 : vector<8x32xf32>
    %25 = math.tanh %24 : vector<8x32xf32>
    %26 = arith.addf %20, %25 : vector<8x32xf32>
    %27 = arith.truncf %25 : vector<8x32xf32> to vector<8x32xbf16>
    %cst_10 = arith.constant dense<0.000000e+00> : vector<8x32xf32>
    %28 = tpu.matmul %27, %0, %cst_10 {dimension_numbers = #tpu.dot_dimension_numbers<[1], [0], [0], [1], [0, 0, 1, 1], [], []>} : vector<8x32xbf16>, vector<32x32xbf16>, vector<8x32xf32> -> vector<8x32xf32>
    %29 = vector.extract_strided_slice %6 {offsets = [32, 0], sizes = [8, 32], strides = [1, 1]} : vector<64x32xf32> to vector<8x32xf32>
    %30 = arith.addf %29, %28 : vector<8x32xf32>
    %31 = math.tanh %30 : vector<8x32xf32>
    %32 = arith.addf %26, %31 : vector<8x32xf32>
    %33 = arith.truncf %31 : vector<8x32xf32> to vector<8x32xbf16>
    %cst_11 = arith.constant dense<0.000000e+00> : vector<8x32xf32>
    %34 = tpu.matmul %33, %0, %cst_11 {dimension_numbers = #tpu.dot_dimension_numbers<[1], [0], [0], [1], [0, 0, 1, 1], [], []>} : vector<8x32xbf16>, vector<32x32xbf16>, vector<8x32xf32> -> vector<8x32xf32>
    %35 = vector.extract_strided_slice %6 {offsets = [40, 0], sizes = [8, 32], strides = [1, 1]} : vector<64x32xf32> to vector<8x32xf32>
    %36 = arith.addf %35, %34 : vector<8x32xf32>
    %37 = math.tanh %36 : vector<8x32xf32>
    %38 = arith.addf %32, %37 : vector<8x32xf32>
    %39 = arith.truncf %37 : vector<8x32xf32> to vector<8x32xbf16>
    %cst_12 = arith.constant dense<0.000000e+00> : vector<8x32xf32>
    %40 = tpu.matmul %39, %0, %cst_12 {dimension_numbers = #tpu.dot_dimension_numbers<[1], [0], [0], [1], [0, 0, 1, 1], [], []>} : vector<8x32xbf16>, vector<32x32xbf16>, vector<8x32xf32> -> vector<8x32xf32>
    %41 = vector.extract_strided_slice %6 {offsets = [48, 0], sizes = [8, 32], strides = [1, 1]} : vector<64x32xf32> to vector<8x32xf32>
    %42 = arith.addf %41, %40 : vector<8x32xf32>
    %43 = math.tanh %42 : vector<8x32xf32>
    %44 = arith.addf %38, %43 : vector<8x32xf32>
    %45 = arith.truncf %43 : vector<8x32xf32> to vector<8x32xbf16>
    %cst_13 = arith.constant dense<0.000000e+00> : vector<8x32xf32>
    %46 = tpu.matmul %45, %0, %cst_13 {dimension_numbers = #tpu.dot_dimension_numbers<[1], [0], [0], [1], [0, 0, 1, 1], [], []>} : vector<8x32xbf16>, vector<32x32xbf16>, vector<8x32xf32> -> vector<8x32xf32>
    %47 = vector.extract_strided_slice %6 {offsets = [56, 0], sizes = [8, 32], strides = [1, 1]} : vector<64x32xf32> to vector<8x32xf32>
    %48 = arith.addf %47, %46 : vector<8x32xf32>
    %49 = math.tanh %48 : vector<8x32xf32>
    %50 = arith.addf %44, %49 : vector<8x32xf32>
    %c0_14 = arith.constant 0 : index
    %c0_15 = arith.constant 0 : index
    %51 = vector.load %arg4[%c0_14, %c0_15] : memref<32x128xf32, #tpu.memory_space<vmem>>, vector<32x128xf32>
    %cst_16 = arith.constant dense<0.000000e+00> : vector<8x128xf32>
    %52 = tpu.matmul %50, %51, %cst_16 {dimension_numbers = #tpu.dot_dimension_numbers<[1], [0], [0], [1], [0, 0, 1, 1], [], []>} : vector<8x32xf32>, vector<32x128xf32>, vector<8x128xf32> -> vector<8x128xf32>
    %c0_17 = arith.constant 0 : index
    %c0_18 = arith.constant 0 : index
    %53 = vector.load %arg5[%c0_17, %c0_18] : memref<1x128xf32, #tpu.memory_space<vmem>>, vector<1x128xf32>
    %54 = vector.broadcast %53 : vector<1x128xf32> to vector<8x128xf32>
    %55 = arith.addf %52, %54 : vector<8x128xf32>
    %cst_19 = arith.constant dense<0xFF800000> : vector<8xf32>
    %56 = vector.multi_reduction <maximumf>, %55, %cst_19 [1] : vector<8x128xf32> to vector<8xf32>
    %57 = vector.shape_cast %56 : vector<8xf32> to vector<8x1xf32>
    %58 = vector.broadcast %57 : vector<8x1xf32> to vector<8x128xf32>
    %59 = arith.subf %55, %58 : vector<8x128xf32>
    %60 = math.exp %59 : vector<8x128xf32>
    %cst_20 = arith.constant dense<0.000000e+00> : vector<8xf32>
    %61 = vector.multi_reduction <add>, %60, %cst_20 [1] : vector<8x128xf32> to vector<8xf32>
    %62 = vector.shape_cast %61 : vector<8xf32> to vector<8x1xf32>
    %63 = math.log %62 : vector<8x1xf32>
    %64 = arith.addf %63, %57 : vector<8x1xf32>
    %65 = vector.broadcast %64 : vector<8x1xf32> to vector<8x128xf32>
    %66 = arith.subf %55, %65 : vector<8x128xf32>
    %c0_21 = arith.constant 0 : index
    %c0_22 = arith.constant 0 : index
    %67 = vector.load %arg6[%c0_21, %c0_22] : memref<8x128xf32, #tpu.memory_space<vmem>>, vector<8x128xf32>
    tpu.vector_store %arg6[%c0_21, %c0_22], %66 {strides = array<i32>} : memref<8x128xf32, #tpu.memory_space<vmem>>, vector<8x128xf32>,
    return
  }
}

</mosaic_0001>

<llo_original>
// kernel: tpu_custom_call.1
$region0: #{tpu_custom_call.1}
  #allocation0 [shape = 'u32[]', space=smem, size = 0x4, offset = 0x4, fixed_abs, tag = 'smem constant byte address 0x4 - core index']
  #allocation1 [shape = 'u32[144,128]{1,0:T(1,128)}', space=vmem, size = 0x12000, scoped, tag = 'internal scratch']
  %s0 = inlined_call_operand.vmem [shape: bf16[64,16], index: 0, kind: input, shape index: {}]
  %s1 = inlined_call_operand.vmem [shape: bf16[16,32], index: 1, kind: input, shape index: {}]
  %s2 = inlined_call_operand.hbm [shape: bf16[32,32], index: 2, kind: input, shape index: {}]
  %s3 = inlined_call_operand.vmem [shape: f32[1,32], index: 3, kind: input, shape index: {}]
  %s4 = inlined_call_operand.vmem [shape: f32[32,128], index: 4, kind: input, shape index: {}]
  %s5 = inlined_call_operand.vmem [shape: f32[1,128], index: 5, kind: input, shape index: {}]
  %s6 = inlined_call_operand.hbm [shape: f32[8,128], index: 6, kind: output, shape index: {}]
  %s7 = sld [smem:[#allocation0]]
  $region38: #{tpu_custom_call.1} parent=0
    _
  %s9 = ssub.s32 1, %s7
  %s10 = scalar_select 0, %s9, %s7
  $region1: #{tpu_custom_call.1} parent=0
    #allocation2 [shape = 'u8[8192]{0}', space=vmem, size = 0x2000, scoped, tag = 'input window, operand 2, single buffered']
    #allocation3 [shape = 's32[1]{0}', space=sflag, size = 0x4, scoped, tag = 'scoped memory for tpu_custom_call.1']
    #allocation4 [shape = 's32[1]{0}', space=sflag, size = 0x4, scoped, tag = 'scoped memory for tpu_custom_call.1']
    #allocation5 [shape = 'u8[4096]{0}', space=vmem, size = 0x1000, scoped, tag = 'output window, operand 0, single buffered']
    %11 = vsyncpa [#allocation3], 0
    %12 = vsyncpa [#allocation4], 0
    // Predicated region
    $region2: #{tpu_custom_call.1} parent=1 // pred_check
      _
    $region3: #{tpu_custom_call.1} parent=1 // pred_check_branch
      %14 = sbr.rel (0) target = $region5
    $region4: #{tpu_custom_call.1} parent=1 // pred_region
      _
    $region5: #{tpu_custom_call.1} parent=1 // pred_fallthru
      _
    // Predicated region
    $region6: #{tpu_custom_call.1} parent=1 // pred_check
      _
    $region7: #{tpu_custom_call.1} parent=1 // pred_check_branch
      %16 = sbr.rel (0) target = $region9
    $region8: #{tpu_custom_call.1} parent=1 // pred_region
      _
    $region9: #{tpu_custom_call.1} parent=1 // pred_fallthru
      _
    // Predicated region
    $region10: #{tpu_custom_call.1} parent=1 // pred_check
      _
    $region11: #{tpu_custom_call.1} parent=1 // pred_check_branch
      %18 = sbr.rel (0) target = $region13
    $region12: #{tpu_custom_call.1} parent=1 // pred_region
      %s20 = ssub.s32 256, 256
      %21 = vsyncadd [#allocation3], %s20
      %s22 = sshll.u32 [#allocation2], 4
      %s23 = int_to_ptr.vmem [resolvable:$true] %s22
      %28 = dma.hbm_to_vmem [thread:$0]  %s2, 256, %s23, [#allocation3], 64, 64, 4
    $region13: #{tpu_custom_call.1} parent=1 // pred_fallthru
      _
    // Predicated region
    $region14: #{tpu_custom_call.1} parent=1 // pred_check
      _
    $region15: #{tpu_custom_call.1} parent=1 // pred_check_branch
      %30 = sbr.rel (0) target = $region17
    $region16: #{tpu_custom_call.1} parent=1 // pred_region
      _
    $region17: #{tpu_custom_call.1} parent=1 // pred_fallthru
      _
    // Predicated region
    $region18: #{tpu_custom_call.1} parent=1 // pred_check
      _
    $region19: #{tpu_custom_call.1} parent=1 // pred_check_branch
      %32 = sbr.rel (0) target = $region21
    $region20: #{tpu_custom_call.1} parent=1 // pred_region
      _
    $region21: #{tpu_custom_call.1} parent=1 // pred_fallthru
      _
    // Predicated region
    $region22: #{tpu_custom_call.1} parent=1 // pred_check
      _
    $region23: #{tpu_custom_call.1} parent=1 // pred_check_branch
      %34 = sbr.rel (0) target = $region25
    $region24: #{tpu_custom_call.1} parent=1 // pred_region
      _
    $region25: #{tpu_custom_call.1} parent=1 // pred_fallthru
      _
    // Predicated region
    $region26: #{tpu_custom_call.1} parent=1 // pred_check
      _
    $region27: #{tpu_custom_call.1} parent=1 // pred_check_branch
      %36 = sbr.rel (0) target = $region29
    $region28: #{tpu_custom_call.1} parent=1 // pred_region
      %37 = dma.done [#allocation3], 256
    $region29: #{tpu_custom_call.1} parent=1 // pred_fallthru
      _
    %v39 = vld [vmem:[#allocation2] sm:$0xf]
    %v40 = vld [vmem:[#allocation2 + $0x4] sm:$0xf]
    %v41 = vld [vmem:[#allocation2 + $0x8] sm:$0xf]
    %v42 = vld [vmem:[#allocation2 + $0xc] sm:$0xf]
    %v43 = vld [vmem:[%s0] sm:$0xf]
    %v44 = vld [vmem:[%s0 + $0x4] sm:$0xf]
    %v45 = vld [vmem:[%s0 + $0x8] sm:$0xf]
    %v46 = vld [vmem:[%s0 + $0xc] sm:$0xf]
    %v47 = vld [vmem:[%s0 + $0x10] sm:$0xf]
    %v48 = vld [vmem:[%s0 + $0x14] sm:$0xf]
    %v49 = vld [vmem:[%s0 + $0x18] sm:$0xf]
    %v50 = vld [vmem:[%s0 + $0x1c] sm:$0xf]
    %v51 = vld [vmem:[%s1] sm:$0xf]
    %v52 = vld [vmem:[%s1 + $0x4] sm:$0xf]
    %v53 = vld [vmem:[%s3] sm:$0x1]
    %v55 = vlaneseq
    %v56 = vshrl.u32 %v55, 7
    %v57 = vsub.s32 0, %v56
    %v58 = vrot.slane %v53, %v57
    %v68 = vunpack.c.l.b16 %v43
    %v69 = vunpack.c.l.b16 %v44
    %v70 = vunpack.c.l.b16 %v45
    %v71 = vunpack.c.l.b16 %v46
    %v72 = vunpack.c.l.b16 %v47
    %v73 = vunpack.c.l.b16 %v48
    %v74 = vunpack.c.l.b16 %v49
    %v75 = vunpack.c.l.b16 %v50
    %v76 = vpack.c.b16 %v69, %v68
    %v77 = vpack.c.b16 %v71, %v70
    %v78 = vpack.c.b16 %v73, %v72
    %v79 = vpack.c.b16 %v75, %v74
    %v82 = vunpack.c.l.b16 %v51
    %v83 = vunpack.c.l.b16 %v52
    %v84 = vpack.c.b16 %v83, %v82
    %vm86 = vcmask 130048
    %v88 = vsel %vm86, %v76, 0
    %v91 = vsel %vm86, %v77, 0
    %v94 = vsel %vm86, %v78, 0
    %v97 = vsel %vm86, %v79, 0
    %99 = vmatprep.subr.bf16.mxu0 0
    %100 = vmatpush1.bf16.msra.mxu0 0
    %101 = vmatprep.subr.bf16.mxu0 0
    %102 = vmatpush1.bf16.msra.mxu0 0
    %103 = vmatprep.subr.bf16.mxu0 0
    %104 = vmatpush1.bf16.msra.mxu0 0
    %105 = vmatprep.subr.bf16.mxu0 0
    %106 = vmatpush1.bf16.msra.mxu0 0
    %107 = vmatprep.subr.bf16.mxu0 0
    %108 = vmatpush1.bf16.msra.mxu0 0
    %109 = vmatprep.subr.bf16.mxu0 0
    %110 = vmatpush1.bf16.msra.mxu0 0
    %111 = vmatprep.subr.bf16.mxu0 0
    %112 = vmatpush1.bf16.msra.mxu0 0
    %113 = vmatprep.subr.bf16.mxu0 0
    %114 = vmatpush1.bf16.msra.mxu0 %v84
    %115 = vmatprep.subr.bf16.mxu0 0
    %116 = vmatpush2.bf16.msra.mxu0 0
    %117 = vmatprep.subr.bf16.mxu0 0
    %118 = vmatpush2.bf16.msra.mxu0 0
    %119 = vmatprep.subr.bf16.mxu0 0
    %120 = vmatpush2.bf16.msra.mxu0 0
    %121 = vmatprep.subr.bf16.mxu0 0
    %122 = vmatpush2.bf16.msra.mxu0 0
    %123 = vmatprep.subr.bf16.mxu0 0
    %124 = vmatpush2.bf16.msra.mxu0 0
    %125 = vmatprep.subr.bf16.mxu0 0
    %126 = vmatpush2.bf16.msra.mxu0 0
    %127 = vmatprep.subr.bf16.mxu0 0
    %128 = vmatpush2.bf16.msra.mxu0 0
    %129 = vmatprep.subr.bf16.mxu0 0
    %130 = vmatpush2.bf16.msra.mxu0 0
    %131 = vmatprep.mubr.bf16.mxu0 0
    %132 = vmatmul.mubr.bf16.gmra.mxu0 %v88
    %v133 = vpop.f32.mrf.mxu0
    %v134 = vadd.f32 %v58, %v133
    %v135 = vpop.f32.mrf.mxu0
    %v136 = vpop.f32.mrf.mxu0
    %v137 = vadd.f32 %v58, %v136
    %v138 = vpop.f32.mrf.mxu0
    %139 = vmatprep.mubr.bf16.mxu0 0
    %140 = vmatmul.mubr.bf16.gmra.mxu0 %v91
    %v141 = vpop.f32.mrf.mxu0
    %v142 = vadd.f32 %v58, %v141
    %v143 = vpop.f32.mrf.mxu0
    %v144 = vpop.f32.mrf.mxu0
    %v145 = vadd.f32 %v58, %v144
    %v146 = vpop.f32.mrf.mxu0
    %147 = vmatprep.mubr.bf16.mxu0 0
    %148 = vmatmul.mubr.bf16.gmra.mxu0 %v94
    %v149 = vpop.f32.mrf.mxu0
    %v150 = vadd.f32 %v58, %v149
    %v151 = vpop.f32.mrf.mxu0
    %v152 = vpop.f32.mrf.mxu0
    %v153 = vadd.f32 %v58, %v152
    %v154 = vpop.f32.mrf.mxu0
    %155 = vmatprep.mubr.bf16.mxu0 0
    %156 = vmatmul.mubr.bf16.gmra.mxu0 %v97
    %v157 = vpop.f32.mrf.mxu0
    %v158 = vadd.f32 %v58, %v157
    %v159 = vpop.f32.mrf.mxu0
    %v160 = vpop.f32.mrf.mxu0
    %v161 = vadd.f32 %v58, %v160
    %v162 = vpop.f32.mrf.mxu0
    %163 = vdwg.mxu0
    %v164 = vtanh.pop %v134
    %v165 = vpack.c.bf16 %v164, %v164
    %v170 = vunpack.c.l.b16 %v39
    %v171 = vunpack.c.l.b16 %v40
    %v172 = vunpack.c.l.b16 %v41
    %v173 = vunpack.c.l.b16 %v42
    %v174 = vpack.c.b16 %v171, %v170
    %v175 = vpack.c.b16 %v173, %v172
    %vm178 = vcmask 261120
    %v180 = vsel %vm178, %v165, 0
    %182 = vmatprep.subr.bf16.mxu0 0
    %183 = vmatpush1.bf16.msra.mxu0 0
    %184 = vmatprep.subr.bf16.mxu0 0
    %185 = vmatpush1.bf16.msra.mxu0 0
    %186 = vmatprep.subr.bf16.mxu0 0
    %187 = vmatpush1.bf16.msra.mxu0 0
    %188 = vmatprep.subr.bf16.mxu0 0
    %189 = vmatpush1.bf16.msra.mxu0 0
    %190 = vmatprep.subr.bf16.mxu0 0
    %191 = vmatpush1.bf16.msra.mxu0 0
    %192 = vmatprep.subr.bf16.mxu0 0
    %193 = vmatpush1.bf16.msra.mxu0 0
    %194 = vmatprep.subr.bf16.mxu0 0
    %195 = vmatpush1.bf16.msra.mxu0 %v175
    %196 = vmatprep.subr.bf16.mxu0 0
    %197 = vmatpush1.bf16.msra.mxu0 %v174
    %198 = vmatprep.subr.bf16.mxu0 0
    %199 = vmatpush2.bf16.msra.mxu0 0
    %200 = vmatprep.subr.bf16.mxu0 0
    %201 = vmatpush2.bf16.msra.mxu0 0
    %202 = vmatprep.subr.bf16.mxu0 0
    %203 = vmatpush2.bf16.msra.mxu0 0
    %204 = vmatprep.subr.bf16.mxu0 0
    %205 = vmatpush2.bf16.msra.mxu0 0
    %206 = vmatprep.subr.bf16.mxu0 0
    %207 = vmatpush2.bf16.msra.mxu0 0
    %208 = vmatprep.subr.bf16.mxu0 0
    %209 = vmatpush2.bf16.msra.mxu0 0
    %210 = vmatprep.subr.bf16.mxu0 0
    %211 = vmatpush2.bf16.msra.mxu0 0
    %212 = vmatprep.subr.bf16.mxu0 0
    %213 = vmatpush2.bf16.msra.mxu0 0
    %214 = vmatprep.mubr.bf16.mxu0 0
    %215 = vmatmul.mubr.bf16.gmra.mxu0 %v180
    %v216 = vpop.f32.mrf.mxu0
    %v217 = vadd.f32 0.0, %v216
    %v218 = vpop.f32.mrf.mxu0
    %v219 = vpop.f32.mrf.mxu0
    %v220 = vpop.f32.mrf.mxu0
    %221 = vdwg.mxu0
    %v222 = vadd.f32 %v137, %v217
    %v223 = vtanh.pop %v222
    %v224 = vadd.f32 %v164, %v223
    %v225 = vpack.c.bf16 %v223, %v223
    %v227 = vsel %vm178, %v225, 0
    %229 = vmatprep.subr.bf16.mxu0 0
    %230 = vmatpush1.bf16.msra.mxu0 0
    %231 = vmatprep.subr.bf16.mxu0 0
    %232 = vmatpush1.bf16.msra.mxu0 0
    %233 = vmatprep.subr.bf16.mxu0 0
    %234 = vmatpush1.bf16.msra.mxu0 0
    %235 = vmatprep.subr.bf16.mxu0 0
    %236 = vmatpush1.bf16.msra.mxu0 0
    %237 = vmatprep.subr.bf16.mxu0 0
    %238 = vmatpush1.bf16.msra.mxu0 0
    %239 = vmatprep.subr.bf16.mxu0 0
    %240 = vmatpush1.bf16.msra.mxu0 0
    %241 = vmatprep.subr.bf16.mxu0 0
    %242 = vmatpush1.bf16.msra.mxu0 %v175
    %243 = vmatprep.subr.bf16.mxu0 0
    %244 = vmatpush1.bf16.msra.mxu0 %v174
    %245 = vmatprep.subr.bf16.mxu0 0
    %246 = vmatpush2.bf16.msra.mxu0 0
    %247 = vmatprep.subr.bf16.mxu0 0
    %248 = vmatpush2.bf16.msra.mxu0 0
    %249 = vmatprep.subr.bf16.mxu0 0
    %250 = vmatpush2.bf16.msra.mxu0 0
    %251 = vmatprep.subr.bf16.mxu0 0
    %252 = vmatpush2.bf16.msra.mxu0 0
    %253 = vmatprep.subr.bf16.mxu0 0
    %254 = vmatpush2.bf16.msra.mxu0 0
    %255 = vmatprep.subr.bf16.mxu0 0
    %256 = vmatpush2.bf16.msra.mxu0 0
    %257 = vmatprep.subr.bf16.mxu0 0
    %258 = vmatpush2.bf16.msra.mxu0 0
    %259 = vmatprep.subr.bf16.mxu0 0
    %260 = vmatpush2.bf16.msra.mxu0 0
    %261 = vmatprep.mubr.bf16.mxu0 0
    %262 = vmatmul.mubr.bf16.gmra.mxu0 %v227
    %v263 = vpop.f32.mrf.mxu0
    %v264 = vadd.f32 0.0, %v263
    %v265 = vpop.f32.mrf.mxu0
    %v266 = vpop.f32.mrf.mxu0
    %v267 = vpop.f32.mrf.mxu0
    %268 = vdwg.mxu0
    %v269 = vadd.f32 %v142, %v264
    %v270 = vtanh.pop %v269
    %v271 = vadd.f32 %v224, %v270
    %v272 = vpack.c.bf16 %v270, %v270
    %v274 = vsel %vm178, %v272, 0
    %276 = vmatprep.subr.bf16.mxu0 0
    %277 = vmatpush1.bf16.msra.mxu0 0
    %278 = vmatprep.subr.bf16.mxu0 0
    %279 = vmatpush1.bf16.msra.mxu0 0
    %280 = vmatprep.subr.bf16.mxu0 0
    %281 = vmatpush1.bf16.msra.mxu0 0
    %282 = vmatprep.subr.bf16.mxu0 0
    %283 = vmatpush1.bf16.msra.mxu0 0
    %284 = vmatprep.subr.bf16.mxu0 0
    %285 = vmatpush1.bf16.msra.mxu0 0
    %286 = vmatprep.subr.bf16.mxu0 0
    %287 = vmatpush1.bf16.msra.mxu0 0
    %288 = vmatprep.subr.bf16.mxu0 0
    %289 = vmatpush1.bf16.msra.mxu0 %v175
    %290 = vmatprep.subr.bf16.mxu0 0
    %291 = vmatpush1.bf16.msra.mxu0 %v174
    %292 = vmatprep.subr.bf16.mxu0 0
    %293 = vmatpush2.bf16.msra.mxu0 0
    %294 = vmatprep.subr.bf16.mxu0 0
    %295 = vmatpush2.bf16.msra.mxu0 0
    %296 = vmatprep.subr.bf16.mxu0 0
    %297 = vmatpush2.bf16.msra.mxu0 0
    %298 = vmatprep.subr.bf16.mxu0 0
    %299 = vmatpush2.bf16.msra.mxu0 0
    %300 = vmatprep.subr.bf16.mxu0 0
    %301 = vmatpush2.bf16.msra.mxu0 0
    %302 = vmatprep.subr.bf16.mxu0 0
    %303 = vmatpush2.bf16.msra.mxu0 0
    %304 = vmatprep.subr.bf16.mxu0 0
    %305 = vmatpush2.bf16.msra.mxu0 0
    %306 = vmatprep.subr.bf16.mxu0 0
    %307 = vmatpush2.bf16.msra.mxu0 0
    %308 = vmatprep.mubr.bf16.mxu0 0
    %309 = vmatmul.mubr.bf16.gmra.mxu0 %v274
    %v310 = vpop.f32.mrf.mxu0
    %v311 = vadd.f32 0.0, %v310
    %v312 = vpop.f32.mrf.mxu0
    %v313 = vpop.f32.mrf.mxu0
    %v314 = vpop.f32.mrf.mxu0
    %315 = vdwg.mxu0
    %v316 = vadd.f32 %v145, %v311
    %v317 = vtanh.pop %v316
    %v318 = vadd.f32 %v271, %v317
    %v319 = vpack.c.bf16 %v317, %v317
    %v321 = vsel %vm178, %v319, 0
    %323 = vmatprep.subr.bf16.mxu0 0
    %324 = vmatpush1.bf16.msra.mxu0 0
    %325 = vmatprep.subr.bf16.mxu0 0
    %326 = vmatpush1.bf16.msra.mxu0 0
    %327 = vmatprep.subr.bf16.mxu0 0
    %328 = vmatpush1.bf16.msra.mxu0 0
    %329 = vmatprep.subr.bf16.mxu0 0
    %330 = vmatpush1.bf16.msra.mxu0 0
    %331 = vmatprep.subr.bf16.mxu0 0
    %332 = vmatpush1.bf16.msra.mxu0 0
    %333 = vmatprep.subr.bf16.mxu0 0
    %334 = vmatpush1.bf16.msra.mxu0 0
    %335 = vmatprep.subr.bf16.mxu0 0
    %336 = vmatpush1.bf16.msra.mxu0 %v175
    %337 = vmatprep.subr.bf16.mxu0 0
    %338 = vmatpush1.bf16.msra.mxu0 %v174
    %339 = vmatprep.subr.bf16.mxu0 0
    %340 = vmatpush2.bf16.msra.mxu0 0
    %341 = vmatprep.subr.bf16.mxu0 0
    %342 = vmatpush2.bf16.msra.mxu0 0
    %343 = vmatprep.subr.bf16.mxu0 0
    %344 = vmatpush2.bf16.msra.mxu0 0
    %345 = vmatprep.subr.bf16.mxu0 0
    %346 = vmatpush2.bf16.msra.mxu0 0
    %347 = vmatprep.subr.bf16.mxu0 0
    %348 = vmatpush2.bf16.msra.mxu0 0
    %349 = vmatprep.subr.bf16.mxu0 0
    %350 = vmatpush2.bf16.msra.mxu0 0
    %351 = vmatprep.subr.bf16.mxu0 0
    %352 = vmatpush2.bf16.msra.mxu0 0
    %353 = vmatprep.subr.bf16.mxu0 0
    %354 = vmatpush2.bf16.msra.mxu0 0
    %355 = vmatprep.mubr.bf16.mxu0 0
    %356 = vmatmul.mubr.bf16.gmra.mxu0 %v321
    %v357 = vpop.f32.mrf.mxu0
    %v358 = vadd.f32 0.0, %v357
    %v359 = vpop.f32.mrf.mxu0
    %v360 = vpop.f32.mrf.mxu0
    %v361 = vpop.f32.mrf.mxu0
    %362 = vdwg.mxu0
    %v363 = vadd.f32 %v150, %v358
    %v364 = vtanh.pop %v363
    %v365 = vadd.f32 %v318, %v364
    %v366 = vpack.c.bf16 %v364, %v364
    %v368 = vsel %vm178, %v366, 0
    %370 = vmatprep.subr.bf16.mxu0 0
    %371 = vmatpush1.bf16.msra.mxu0 0
    %372 = vmatprep.subr.bf16.mxu0 0
    %373 = vmatpush1.bf16.msra.mxu0 0
    %374 = vmatprep.subr.bf16.mxu0 0
    %375 = vmatpush1.bf16.msra.mxu0 0
    %376 = vmatprep.subr.bf16.mxu0 0
    %377 = vmatpush1.bf16.msra.mxu0 0
    %378 = vmatprep.subr.bf16.mxu0 0
    %379 = vmatpush1.bf16.msra.mxu0 0
    %380 = vmatprep.subr.bf16.mxu0 0
    %381 = vmatpush1.bf16.msra.mxu0 0
    %382 = vmatprep.subr.bf16.mxu0 0
    %383 = vmatpush1.bf16.msra.mxu0 %v175
    %384 = vmatprep.subr.bf16.mxu0 0
    %385 = vmatpush1.bf16.msra.mxu0 %v174
    %386 = vmatprep.subr.bf16.mxu0 0
    %387 = vmatpush2.bf16.msra.mxu0 0
    %388 = vmatprep.subr.bf16.mxu0 0
    %389 = vmatpush2.bf16.msra.mxu0 0
    %390 = vmatprep.subr.bf16.mxu0 0
    %391 = vmatpush2.bf16.msra.mxu0 0
    %392 = vmatprep.subr.bf16.mxu0 0
    %393 = vmatpush2.bf16.msra.mxu0 0
    %394 = vmatprep.subr.bf16.mxu0 0
    %395 = vmatpush2.bf16.msra.mxu0 0
    %396 = vmatprep.subr.bf16.mxu0 0
    %397 = vmatpush2.bf16.msra.mxu0 0
    %398 = vmatprep.subr.bf16.mxu0 0
    %399 = vmatpush2.bf16.msra.mxu0 0
    %400 = vmatprep.subr.bf16.mxu0 0
    %401 = vmatpush2.bf16.msra.mxu0 0
    %402 = vmatprep.mubr.bf16.mxu0 0
    %403 = vmatmul.mubr.bf16.gmra.mxu0 %v368
    %v404 = vpop.f32.mrf.mxu0
    %v405 = vadd.f32 0.0, %v404
    %v406 = vpop.f32.mrf.mxu0
    %v407 = vpop.f32.mrf.mxu0
    %v408 = vpop.f32.mrf.mxu0
    %409 = vdwg.mxu0
    %v410 = vadd.f32 %v153, %v405
    %v411 = vtanh.pop %v410
    %v412 = vadd.f32 %v365, %v411
    %v413 = vpack.c.bf16 %v411, %v411
    %v415 = vsel %vm178, %v413, 0
    %417 = vmatprep.subr.bf16.mxu0 0
    %418 = vmatpush1.bf16.msra.mxu0 0
    %419 = vmatprep.subr.bf16.mxu0 0
    %420 = vmatpush1.bf16.msra.mxu0 0
    %421 = vmatprep.subr.bf16.mxu0 0
    %422 = vmatpush1.bf16.msra.mxu0 0
    %423 = vmatprep.subr.bf16.mxu0 0
    %424 = vmatpush1.bf16.msra.mxu0 0
    %425 = vmatprep.subr.bf16.mxu0 0
    %426 = vmatpush1.bf16.msra.mxu0 0
    %427 = vmatprep.subr.bf16.mxu0 0
    %428 = vmatpush1.bf16.msra.mxu0 0
    %429 = vmatprep.subr.bf16.mxu0 0
    %430 = vmatpush1.bf16.msra.mxu0 %v175
    %431 = vmatprep.subr.bf16.mxu0 0
    %432 = vmatpush1.bf16.msra.mxu0 %v174
    %433 = vmatprep.subr.bf16.mxu0 0
    %434 = vmatpush2.bf16.msra.mxu0 0
    %435 = vmatprep.subr.bf16.mxu0 0
    %436 = vmatpush2.bf16.msra.mxu0 0
    %437 = vmatprep.subr.bf16.mxu0 0
    %438 = vmatpush2.bf16.msra.mxu0 0
    %439 = vmatprep.subr.bf16.mxu0 0
    %440 = vmatpush2.bf16.msra.mxu0 0
    %441 = vmatprep.subr.bf16.mxu0 0
    %442 = vmatpush2.bf16.msra.mxu0 0
    %443 = vmatprep.subr.bf16.mxu0 0
    %444 = vmatpush2.bf16.msra.mxu0 0
    %445 = vmatprep.subr.bf16.mxu0 0
    %446 = vmatpush2.bf16.msra.mxu0 0
    %447 = vmatprep.subr.bf16.mxu0 0
    %448 = vmatpush2.bf16.msra.mxu0 0
    %449 = vmatprep.mubr.bf16.mxu0 0
    %450 = vmatmul.mubr.bf16.gmra.mxu0 %v415
    %v451 = vpop.f32.mrf.mxu0
    %v452 = vadd.f32 0.0, %v451
    %v453 = vpop.f32.mrf.mxu0
    %v454 = vpop.f32.mrf.mxu0
    %v455 = vpop.f32.mrf.mxu0
    %456 = vdwg.mxu0
    %v457 = vadd.f32 %v158, %v452
    %v458 = vtanh.pop %v457
    %v459 = vadd.f32 %v412, %v458
    %v460 = vpack.c.bf16 %v458, %v458
    %v462 = vsel %vm178, %v460, 0
    %464 = vmatprep.subr.bf16.mxu0 0
    %465 = vmatpush1.bf16.msra.mxu0 0
    %466 = vmatprep.subr.bf16.mxu0 0
    %467 = vmatpush1.bf16.msra.mxu0 0
    %468 = vmatprep.subr.bf16.mxu0 0
    %469 = vmatpush1.bf16.msra.mxu0 0
    %470 = vmatprep.subr.bf16.mxu0 0
    %471 = vmatpush1.bf16.msra.mxu0 0
    %472 = vmatprep.subr.bf16.mxu0 0
    %473 = vmatpush1.bf16.msra.mxu0 0
    %474 = vmatprep.subr.bf16.mxu0 0
    %475 = vmatpush1.bf16.msra.mxu0 0
    %476 = vmatprep.subr.bf16.mxu0 0
    %477 = vmatpush1.bf16.msra.mxu0 %v175
    %478 = vmatprep.subr.bf16.mxu0 0
    %479 = vmatpush1.bf16.msra.mxu0 %v174
    %480 = vmatprep.subr.bf16.mxu0 0
    %481 = vmatpush2.bf16.msra.mxu0 0
    %482 = vmatprep.subr.bf16.mxu0 0
    %483 = vmatpush2.bf16.msra.mxu0 0
    %484 = vmatprep.subr.bf16.mxu0 0
    %485 = vmatpush2.bf16.msra.mxu0 0
    %486 = vmatprep.subr.bf16.mxu0 0
    %487 = vmatpush2.bf16.msra.mxu0 0
    %488 = vmatprep.subr.bf16.mxu0 0
    %489 = vmatpush2.bf16.msra.mxu0 0
    %490 = vmatprep.subr.bf16.mxu0 0
    %491 = vmatpush2.bf16.msra.mxu0 0
    %492 = vmatprep.subr.bf16.mxu0 0
    %493 = vmatpush2.bf16.msra.mxu0 0
    %494 = vmatprep.subr.bf16.mxu0 0
    %495 = vmatpush2.bf16.msra.mxu0 0
    %496 = vmatprep.mubr.bf16.mxu0 0
    %497 = vmatmul.mubr.bf16.gmra.mxu0 %v462
    %v498 = vpop.f32.mrf.mxu0
    %v499 = vadd.f32 0.0, %v498
    %v500 = vpop.f32.mrf.mxu0
    %v501 = vpop.f32.mrf.mxu0
    %v502 = vpop.f32.mrf.mxu0
    %503 = vdwg.mxu0
    %v504 = vadd.f32 %v161, %v499
    %v505 = vtanh.pop %v504
    %v506 = vadd.f32 %v459, %v505
    %v507 = vld [vmem:[%s4] sm:$0xff]
    %v508 = vld [vmem:[%s4 + $0x8] sm:$0xff]
    %v509 = vld [vmem:[%s4 + $0x10] sm:$0xff]
    %v510 = vld [vmem:[%s4 + $0x18] sm:$0xff]
    %v511 = vld [vmem:[%s5] sm:$0x1]
    %v513 = vlaneseq
    %v514 = vshrl.u32 %v513, 7
    %v515 = vsub.s32 0, %v514
    %v516 = vrot.slane %v511, %v515
    %v519 = vsel %vm178, %v506, 0
    %521 = vmatprep.subr.mxu0 0.0
    %522 = vmatpush1.msra.mxu0 0.0
    %523 = vmatprep.subr.mxu0 0.0
    %524 = vmatpush1.msra.mxu0 0.0
    %525 = vmatprep.subr.mxu0 0.0
    %526 = vmatpush1.msra.mxu0 0.0
    %527 = vmatprep.subr.mxu0 0.0
    %528 = vmatpush1.msra.mxu0 0.0
    %529 = vmatprep.subr.mxu0 0.0
    %530 = vmatpush1.msra.mxu0 0.0
    %531 = vmatprep.subr.mxu0 0.0
    %532 = vmatpush1.msra.mxu0 0.0
    %533 = vmatprep.subr.mxu0 0.0
    %534 = vmatpush1.msra.mxu0 0.0
    %535 = vmatprep.subr.mxu0 0.0
    %536 = vmatpush1.msra.mxu0 0.0
    %537 = vmatprep.subr.mxu0 0.0
    %538 = vmatpush1.msra.mxu0 0.0
    %539 = vmatprep.subr.mxu0 0.0
    %540 = vmatpush1.msra.mxu0 0.0
    %541 = vmatprep.subr.mxu0 0.0
    %542 = vmatpush1.msra.mxu0 0.0
    %543 = vmatprep.subr.mxu0 0.0
    %544 = vmatpush1.msra.mxu0 0.0
    %545 = vmatprep.subr.mxu0 0.0
    %546 = vmatpush1.msra.mxu0 %v510
    %547 = vmatprep.subr.mxu0 0.0
    %548 = vmatpush1.msra.mxu0 %v509
    %549 = vmatprep.subr.mxu0 0.0
    %550 = vmatpush1.msra.mxu0 %v508
    %551 = vmatprep.subr.mxu0 0.0
    %552 = vmatpush1.msra.mxu0 %v507
    %553 = vmatprep.subr.mxu0 0.0
    %554 = vmatpush2.msra.mxu0 0.0
    %555 = vmatprep.subr.mxu0 0.0
    %556 = vmatpush2.msra.mxu0 0.0
    %557 = vmatprep.subr.mxu0 0.0
    %558 = vmatpush2.msra.mxu0 0.0
    %559 = vmatprep.subr.mxu0 0.0
    %560 = vmatpush2.msra.mxu0 0.0
    %561 = vmatprep.subr.mxu0 0.0
    %562 = vmatpush2.msra.mxu0 0.0
    %563 = vmatprep.subr.mxu0 0.0
    %564 = vmatpush2.msra.mxu0 0.0
    %565 = vmatprep.subr.mxu0 0.0
    %566 = vmatpush2.msra.mxu0 0.0
    %567 = vmatprep.subr.mxu0 0.0
    %568 = vmatpush2.msra.mxu0 0.0
    %569 = vmatprep.subr.mxu0 0.0
    %570 = vmatpush2.msra.mxu0 0.0
    %571 = vmatprep.subr.mxu0 0.0
    %572 = vmatpush2.msra.mxu0 0.0
    %573 = vmatprep.subr.mxu0 0.0
    %574 = vmatpush2.msra.mxu0 0.0
    %575 = vmatprep.subr.mxu0 0.0
    %576 = vmatpush2.msra.mxu0 0.0
    %577 = vmatprep.subr.mxu0 0.0
    %578 = vmatpush2.msra.mxu0 0.0
    %579 = vmatprep.subr.mxu0 0.0
    %580 = vmatpush2.msra.mxu0 0.0
    %581 = vmatprep.subr.mxu0 0.0
    %582 = vmatpush2.msra.mxu0 0.0
    %583 = vmatprep.subr.mxu0 0.0
    %584 = vmatpush2.msra.mxu0 0.0
    %585 = vmatprep.mubr.f32.mxu0 0.0
    %586 = vmatmul.mubr.f32.gmra.mxu0 %v519
    %v587 = vpop.f32.mrf.mxu0
    %v588 = vadd.f32 %v516, %v587
    %v589 = vpop.f32.mrf.mxu0
    %590 = vdwg.mxu0
    %591 = vmax.xlane.f32.xlu0 %v588
    %v592 = vpop.xlane.xlu0 %591
    %v593 = vsub.f32 %v588, %v592
    %v594 = vmul.f32 %v593, 1.442695
    %v595 = vpow.pop %v594
    %596 = vadd.xlane.f32.xlu0 %v595
    %v597 = vpop.xlane.xlu0 %596
    %v598 = vlog2.pop %v597
    %v599 = vmul.f32 %v598, 0.6931472
    %v600 = vadd.f32 %v599, %v592
    %v601 = vsub.f32 %v588, %v600
    %602 = vst [vmem:[#allocation5] sm:$0xff] %v601
    // Predicated region
    $region30: #{tpu_custom_call.1} parent=1 // pred_check
      _
    $region31: #{tpu_custom_call.1} parent=1 // pred_check_branch
      %604 = sbr.rel (0) target = $region33
    $region32: #{tpu_custom_call.1} parent=1 // pred_region
      %s606 = ssub.s32 128, 128
      %607 = vsyncadd [#allocation4], %s606
      %s609 = sshll.u32 [#allocation5], 4
      %s610 = int_to_ptr.vmem [resolvable:$true] %s609
      %612 = dma.vmem_to_hbm [thread:$0]  %s610, 128, %s6, [#allocation4]
    $region33: #{tpu_custom_call.1} parent=1 // pred_fallthru
      _
    // Predicated region
    $region34: #{tpu_custom_call.1} parent=1 // pred_check
      _
    $region35: #{tpu_custom_call.1} parent=1 // pred_check_branch
      %614 = sbr.rel (0) target = $region37
    $region36: #{tpu_custom_call.1} parent=1 // pred_region
      %615 = dma.done [#allocation4], 128
    $region37: #{tpu_custom_call.1} parent=1 // pred_fallthru
      _
    %616 = vsyncpa [#allocation3], 1
    %617 = vsyncpa [#allocation4], 1

</llo_original>
